<compile_context>
chip_gen: v7x
topology: tpu7x:2x2x1
jax: 0.10.0
libtpu: 0.0.40
codegen_flags: <defaults>
</compile_context>

<pallas_src>
import math

import jax
import jax.numpy as jnp
from jax.experimental import pallas as pl
from jax.experimental.pallas import tpu as pltpu


_LANE = 128
_SMALL_VMEM_BUDGET = 8 * 1024 * 1024    # no-grid path: total resident bytes
_TILE_VMEM_BUDGET = 10 * 1024 * 1024    # tiled path: per-step working set
_MAX_ROW_TILE = 2048


def _group_chunks(sizes):
    """Group consecutive inputs so every group's output offset is a multiple
    of 128 lanes.  Only the last group's store may end lane-misaligned."""
    groups = []
    off = 0
    cur_off, cur = 0, []
    for i, s in enumerate(sizes):
        if not cur:
            cur_off = off
        cur.append((i, s))
        off += s
        if off % _LANE == 0:
            groups.append((cur_off, tuple(cur)))
            cur = []
    if cur:
        groups.append((cur_off, tuple(cur)))
    return tuple(groups)


def _make_concat_kernel(groups):
    """Kernel writing each group of inputs into its static, lane-aligned slice
    of the output ref (single chunk -> direct store; multi-chunk -> in-register
    concat then one aligned store)."""

    def kernel(*refs):
        *in_refs, out_ref = refs
        for off, chunks in groups:
            if len(chunks) == 1:
                i, s = chunks[0]
                out_ref[:, off:off + s] = in_refs[i][...].astype(out_ref.dtype)
            else:
                vals = [in_refs[i][...].astype(out_ref.dtype) for i, _ in chunks]
                slab = jnp.concatenate(vals, axis=-1)
                out_ref[:, off:off + slab.shape[-1]] = slab

    return kernel


def concatenate(xs):
    """torch.concat(xs, dim=-1) for a list of arrays with equal leading dims."""
    assert len(xs) >= 1
    lead_shape = xs[0].shape[:-1]
    for a in xs:
        assert a.shape[:-1] == lead_shape, "leading dims must match for concat(dim=-1)"

    out_dtype = jnp.result_type(*xs)
    out_itemsize = jnp.dtype(out_dtype).itemsize
    sizes = [int(a.shape[-1]) for a in xs]
    total = sum(sizes)
    rows = int(math.prod(lead_shape)) if lead_shape else 1

    # Keep original dtypes (no wrapper-side astype => no extra HBM pass);
    # the in-kernel cast to out_dtype is free on the VPU.
    xs2 = [a.reshape(rows, s) for a, s in zip(xs, sizes)]

    groups = _group_chunks(sizes)
    kernel = _make_concat_kernel(groups)

    in_bytes = sum(rows * s * jnp.dtype(a.dtype).itemsize for a, s in zip(xs, sizes))
    out_bytes = rows * total * out_itemsize
    cost = pl.CostEstimate(flops=0, transcendentals=0,
                           bytes_accessed=in_bytes + out_bytes)
    out_shape = jax.ShapeDtypeStruct((rows, total), out_dtype)

    # Sublane packing: 8 rows for 32-bit, 16 for 16-bit, 32 for 8-bit dtypes.
    min_itemsize = min([jnp.dtype(a.dtype).itemsize for a in xs] + [out_itemsize])
    pack = 8 * max(1, 4 // min_itemsize)

    # Per-row working-set bytes at one grid step (inputs + output, x2 for
    # double-buffering of the pipelined blocks).
    bytes_per_row = 2 * (sum(s * jnp.dtype(a.dtype).itemsize
                             for a, s in zip(xs, sizes)) + total * out_itemsize)

    small_resident = in_bytes + out_bytes
    use_grid = (rows > pack) and (small_resident > _SMALL_VMEM_BUDGET)

    if use_grid:
        # --- Row-tiled, pipelined path for big inputs --------------------
        row_tile = max(1, _TILE_VMEM_BUDGET // bytes_per_row)
        row_tile = min(row_tile, _MAX_ROW_TILE)
        if rows >= 2 * pack:
            # Make sure the "parallel" axis has >= 2 steps so both v7x
            # TensorCores / v6e megacore halves share the bandwidth-bound copy.
            half_up = ((rows + 1) // 2 + pack - 1) // pack * pack
            row_tile = min(row_tile, half_up)
        row_tile = max(pack, (row_tile // pack) * pack)

        vmem_limit = None
        needed = row_tile * bytes_per_row
        if needed > 14 * 1024 * 1024:
            # Ultra-wide rows forced a big minimum block: raise the scoped
            # VMEM limit (kept under the smallest physical VMEM, 64 MiB v7x).
            vmem_limit = int(min(needed + (4 << 20), 56 << 20))

        grid = (pl.cdiv(rows, row_tile),)  # ragged last block handled by Pallas
        in_specs = [pl.BlockSpec((row_tile, s), lambda i: (i, 0)) for s in sizes]
        out_specs = pl.BlockSpec((row_tile, total), lambda i: (i, 0))
        out = pl.pallas_call(
            kernel,
            out_shape=out_shape,
            grid=grid,
            in_specs=in_specs,
            out_specs=out_specs,
            cost_estimate=cost,
            compiler_params=pltpu.CompilerParams(
                dimension_semantics=("parallel",),
                vmem_limit_bytes=vmem_limit),
        )(*xs2)
    else:
        # --- Small inputs: single invocation, everything resident in VMEM ---
        in_specs = [pl.BlockSpec(memory_space=pltpu.MemorySpace.VMEM) for _ in xs2]
        out_specs = pl.BlockSpec(memory_space=pltpu.MemorySpace.VMEM)
        out = pl.pallas_call(
            kernel,
            out_shape=out_shape,
            in_specs=in_specs,
            out_specs=out_specs,
            cost_estimate=cost,
        )(*xs2)

    return out.reshape(lead_shape + (total,))


if __name__ == "__main__":
    key = jax.random.PRNGKey(0)
    k1, k2, k3, k4, k5 = jax.random.split(key, 5)

    # Small case consistent with the module: batch=2, seq=8, mixed widths and
    # mixed dtypes (exercises the in-kernel cast + lane-aligned store grouping:
    # groups are [0:128] direct and [128:224] as one in-register slab).
    x0 = jax.random.normal(k1, (2, 8, 128), dtype=jnp.float32)
    x1 = jax.random.normal(k2, (2, 8, 64), dtype=jnp.bfloat16)
    x2 = jax.random.normal(k3, (2, 8, 32), dtype=jnp.float32)

    out = jax.block_until_ready(concatenate([x0, x1, x2]))
    ref = jnp.concatenate([x0, x1, x2], axis=-1)
    assert out.shape == (2, 8, 224) and out.dtype == ref.dtype
    assert jnp.array_equal(out, ref)

    # Larger case exercising the row-tiled "parallel" grid path with a row
    # count that is NOT a multiple of the tile (ragged last block via cdiv).
    y0 = jax.random.normal(k4, (4, 1023, 256), dtype=jnp.float32)
    y1 = jax.random.normal(k5, (4, 1023, 256), dtype=jnp.float32)
    out2 = jax.block_until_ready(concatenate([y0, y1]))
    ref2 = jnp.concatenate([y0, y1], axis=-1)
    assert out2.shape == (4, 1023, 512)
    assert jnp.array_equal(out2, ref2)

    print("KERNEL_OK")
</pallas_src>

<mosaic_0001>
module attributes {stable_mosaic.version = 11 : i64} {
  func.func @kernel(%arg0: memref<16x128xf32, #tpu.memory_space<vmem>>, %arg1: memref<16x64xbf16, #tpu.memory_space<vmem>>, %arg2: memref<16x32xf32, #tpu.memory_space<vmem>>, %arg3: memref<16x224xf32, #tpu.memory_space<vmem>>) attributes {dimension_semantics = [], scalar_prefetch = 0 : i64, scratch_operands = 0 : i64, tpu.core_type = #tpu.core_type<tc>} {
    %c0 = arith.constant 0 : index
    %c0_0 = arith.constant 0 : index
    %0 = vector.load %arg0[%c0, %c0_0] : memref<16x128xf32, #tpu.memory_space<vmem>>, vector<16x128xf32>
    %c0_1 = arith.constant 0 : index
    %c0_2 = arith.constant 0 : index
    %1 = vector.load %arg3[%c0_1, %c0_2] : memref<16x224xf32, #tpu.memory_space<vmem>>, vector<16x128xf32>
    tpu.vector_store %arg3[%c0_1, %c0_2], %0 {strides = array<i32>} : memref<16x224xf32, #tpu.memory_space<vmem>>, vector<16x128xf32>,
    %c0_3 = arith.constant 0 : index
    %c0_4 = arith.constant 0 : index
    %2 = vector.load %arg1[%c0_3, %c0_4] : memref<16x64xbf16, #tpu.memory_space<vmem>>, vector<16x64xbf16>
    %3 = arith.extf %2 : vector<16x64xbf16> to vector<16x64xf32>
    %c0_5 = arith.constant 0 : index
    %c0_6 = arith.constant 0 : index
    %4 = vector.load %arg2[%c0_5, %c0_6] : memref<16x32xf32, #tpu.memory_space<vmem>>, vector<16x32xf32>
    %5 = tpu.concatenate %3, %4 in 1 : vector<16x64xf32>, vector<16x32xf32> -> vector<16x96xf32>
    %c0_7 = arith.constant 0 : index
    %c128 = arith.constant 128 : index
    %6 = vector.load %arg3[%c0_7, %c128] : memref<16x224xf32, #tpu.memory_space<vmem>>, vector<16x96xf32>
    tpu.vector_store %arg3[%c0_7, %c128], %5 {strides = array<i32>} : memref<16x224xf32, #tpu.memory_space<vmem>>, vector<16x96xf32>,
    return
  }
}

</mosaic_0001>

<llo_original>
// kernel: tpu_custom_call.1
$region0: #{tpu_custom_call.1}
  #allocation0 [shape = 'u32[]', space=smem, size = 0x4, offset = 0x4, fixed_abs, tag = 'smem constant byte address 0x4 - core index']
  #allocation1 [shape = 'u32[144,128]{1,0:T(1,128)}', space=vmem, size = 0x12000, scoped, tag = 'internal scratch']
  %s0 = inlined_call_operand.hbm [shape: f32[16,128], index: 0, kind: input, shape index: {}]
  %s1 = inlined_call_operand.hbm [shape: bf16[16,64], index: 1, kind: input, shape index: {}]
  %s2 = inlined_call_operand.hbm [shape: f32[16,32], index: 2, kind: input, shape index: {}]
  %s3 = inlined_call_operand.hbm [shape: f32[16,224], index: 3, kind: output, shape index: {}]
  %s4 = sld [smem:[#allocation0]]
  $region34: #{tpu_custom_call.1} parent=0
    _
  %s6 = ssub.s32 1, %s4
  %s7 = scalar_select 0, %s6, %s4
  $region1: #{tpu_custom_call.1} parent=0
    #allocation2 [shape = 'u8[8192]{0}', space=vmem, size = 0x2000, scoped, tag = 'input window, operand 0, single buffered']
    #allocation3 [shape = 's32[1]{0}', space=sflag, size = 0x4, scoped, tag = 'scoped memory for tpu_custom_call.1']
    #allocation4 [shape = 's32[1]{0}', space=sflag, size = 0x4, scoped, tag = 'scoped memory for tpu_custom_call.1']
    #allocation5 [shape = 'u8[4096]{0}', space=vmem, size = 0x1000, scoped, tag = 'input window, operand 1, single buffered']
    #allocation6 [shape = 's32[1]{0}', space=sflag, size = 0x4, scoped, tag = 'scoped memory for tpu_custom_call.1']
    #allocation7 [shape = 'u8[8192]{0}', space=vmem, size = 0x2000, scoped, tag = 'input window, operand 2, single buffered']
    #allocation8 [shape = 'u8[16384]{0}', space=vmem, size = 0x4000, scoped, tag = 'output window, operand 0, single buffered']
    %8 = vsyncpa [#allocation3], 0
    %9 = vsyncpa [#allocation6], 0
    %10 = vsyncpa [#allocation4], 0
    // Predicated region
    $region2: #{tpu_custom_call.1} parent=1 // pred_check
      _
    $region3: #{tpu_custom_call.1} parent=1 // pred_check_branch
      %12 = sbr.rel (0) target = $region5
    $region4: #{tpu_custom_call.1} parent=1 // pred_region
      %s14 = ssub.s32 256, 256
      %15 = vsyncadd [#allocation3], %s14
      %s16 = sshll.u32 [#allocation2], 4
      %s17 = int_to_ptr.vmem [resolvable:$true] %s16
      %22 = dma.hbm_to_vmem [thread:$0]  %s0, 256, %s17, [#allocation3], 128, 128, 8
    $region5: #{tpu_custom_call.1} parent=1 // pred_fallthru
      _
    // Predicated region
    $region6: #{tpu_custom_call.1} parent=1 // pred_check
      _
    $region7: #{tpu_custom_call.1} parent=1 // pred_check_branch
      %24 = sbr.rel (0) target = $region9
    $region8: #{tpu_custom_call.1} parent=1 // pred_region
      %s26 = ssub.s32 128, 128
      %27 = vsyncadd [#allocation6], %s26
      %s28 = sshll.u32 [#allocation5], 4
      %s29 = int_to_ptr.vmem [resolvable:$true] %s28
      %34 = dma.hbm_to_vmem [thread:$0]  %s1, 128, %s29, [#allocation6], 64, 64, 4
    $region9: #{tpu_custom_call.1} parent=1 // pred_fallthru
      _
    // Predicated region
    $region10: #{tpu_custom_call.1} parent=1 // pred_check
      _
    $region11: #{tpu_custom_call.1} parent=1 // pred_check_branch
      %36 = sbr.rel (0) target = $region13
    $region12: #{tpu_custom_call.1} parent=1 // pred_region
      %s38 = ssub.s32 256, 256
      %39 = vsyncadd [#allocation6], %s38
      %s40 = sshll.u32 [#allocation7], 4
      %s41 = int_to_ptr.vmem [resolvable:$true] %s40
      %46 = dma.hbm_to_vmem [thread:$0]  %s2, 256, %s41, [#allocation6], 128, 128, 8
    $region13: #{tpu_custom_call.1} parent=1 // pred_fallthru
      _
    // Predicated region
    $region14: #{tpu_custom_call.1} parent=1 // pred_check
      _
    $region15: #{tpu_custom_call.1} parent=1 // pred_check_branch
      %48 = sbr.rel (0) target = $region17
    $region16: #{tpu_custom_call.1} parent=1 // pred_region
      %49 = dma.done [#allocation3], 256
    $region17: #{tpu_custom_call.1} parent=1 // pred_fallthru
      _
    // Predicated region
    $region18: #{tpu_custom_call.1} parent=1 // pred_check
      _
    $region19: #{tpu_custom_call.1} parent=1 // pred_check_branch
      %51 = sbr.rel (0) target = $region21
    $region20: #{tpu_custom_call.1} parent=1 // pred_region
      %52 = dma.done [#allocation6], 128
    $region21: #{tpu_custom_call.1} parent=1 // pred_fallthru
      _
    // Predicated region
    $region22: #{tpu_custom_call.1} parent=1 // pred_check
      _
    $region23: #{tpu_custom_call.1} parent=1 // pred_check_branch
      %54 = sbr.rel (0) target = $region25
    $region24: #{tpu_custom_call.1} parent=1 // pred_region
      %55 = dma.done [#allocation6], 256
    $region25: #{tpu_custom_call.1} parent=1 // pred_fallthru
      _
    %v56 = vld [vmem:[#allocation2] sm:$0xff]
    %v57 = vld [vmem:[#allocation2 + $0x8] sm:$0xff]
    %58 = vst [vmem:[#allocation8] sm:$0xff] %v56
    %59 = vst [vmem:[#allocation8 + $0x10] sm:$0xff] %v57
    %v60 = vld [vmem:[#allocation5] sm:$0xf]
    %v61 = vld [vmem:[#allocation5 + $0x4] sm:$0xf]
    %v62 = vunpack.c.l.bf16 %v60
    %v63 = vunpack.c.l.bf16 %v61
    %v64 = vld [vmem:[#allocation7] sm:$0xff]
    %v65 = vld [vmem:[#allocation7 + $0x8] sm:$0xff]
    %68 = vrot.lane.b32.xlu0 %v64, 64
    %v69 = vpop.permute.xlu0 %68
    %70 = vrot.lane.b32.xlu0 %v65, 64
    %v71 = vpop.permute.xlu0 %70
    %vm74 = vcmask 523264
    %v75 = vsel %vm74, %v62, %v69
    %v76 = vsel %vm74, %v63, %v71
    %vm77 = vcmask 785408
    %78 = vst.msk [vmem:[#allocation8 + $0x8] sm:$0xff] %vm77, %v75
    %79 = vst.msk [vmem:[#allocation8 + $0x18] sm:$0xff] %vm77, %v76
    // Predicated region
    $region26: #{tpu_custom_call.1} parent=1 // pred_check
      _
    $region27: #{tpu_custom_call.1} parent=1 // pred_check_branch
      %81 = sbr.rel (0) target = $region29
    $region28: #{tpu_custom_call.1} parent=1 // pred_region
      %s83 = ssub.s32 512, 512
      %84 = vsyncadd [#allocation4], %s83
      %s85 = sshll.u32 [#allocation8], 4
      %s86 = int_to_ptr.vmem [resolvable:$true] %s85
      %91 = dma.vmem_to_hbm [thread:$0]  %s86, 512, %s3, [#allocation4], 256, 256, 16
    $region29: #{tpu_custom_call.1} parent=1 // pred_fallthru
      _
    // Predicated region
    $region30: #{tpu_custom_call.1} parent=1 // pred_check
      _
    $region31: #{tpu_custom_call.1} parent=1 // pred_check_branch
      %93 = sbr.rel (0) target = $region33
    $region32: #{tpu_custom_call.1} parent=1 // pred_region
      %94 = dma.done [#allocation4], 512
    $region33: #{tpu_custom_call.1} parent=1 // pred_fallthru
      _
    %95 = vsyncpa [#allocation3], 1
    %96 = vsyncpa [#allocation6], 1
    %97 = vsyncpa [#allocation4], 1

</llo_original>
